<compile_context>
chip_gen: v6e
topology: v6e:2x2x1
jax: 0.10.0
libtpu: 0.0.40
codegen_flags: <defaults>
</compile_context>

<pallas_src>
import jax
import jax.numpy as jnp
from jax.experimental import pallas as pl
from jax.experimental.pallas import tpu as pltpu

BN_EPS = 1e-5


def _round_up(x, m):
    return (x + m - 1) // m * m


def _vmem_limits():
    """(tile-fit budget bytes, vmem_limit_bytes) — conservative per-generation sizing."""
    cap = 64 * 1024 * 1024          # fallback: v7x physical VMEM (safe lower bound everywhere)
    try:
        cap = int(pltpu.get_tpu_info().vmem_capacity_bytes)
    except Exception:
        pass
    return int(cap * 0.60), int(cap * 0.75)


def _tile_footprint(tm, k_dim, f_pad):
    """Worst-case VMEM bytes across the two passes for a given row tile (double-buffered)."""
    pass1 = (2 * tm * k_dim * 2          # patches in (bf16, 2 bufs)
             + 2 * k_dim * f_pad * 2     # resident weight (counted x2 conservatively)
             + 2 * tm * f_pad * 2        # y out (bf16, 2 bufs)
             + 2 * 8 * f_pad * 4)        # stats block
    pass2 = (2 * tm * f_pad * 2          # y in (bf16, 2 bufs)
             + 2 * tm * f_pad * 4        # out (f32, 2 bufs)
             + 4 * f_pad * 4)            # scale/shift
    return max(pass1, pass2)


def _conv_stats_kernel(p_ref, w_ref, y_ref, stats_ref):
    """Pass 1: y = p @ w on the MXU; emit y (bf16) and accumulate per-channel [sum; sum(y^2)]."""
    t = pl.program_id(1)   # reduction axis ("arbitrary"); axis 0 is the per-core split

    @pl.when(t == 0)
    def _init():
        stats_ref[...] = jnp.zeros_like(stats_ref)

    y = jnp.dot(p_ref[...], w_ref[...], preferred_element_type=jnp.float32)
    y_ref[...] = y.astype(y_ref.dtype)

    upd = jnp.concatenate([jnp.sum(y, axis=0, keepdims=True),
                           jnp.sum(y * y, axis=0, keepdims=True)], axis=0)   # (2, F_pad)
    stats_ref[0:2, :] = stats_ref[0:2, :] + upd


def _bn_affine_kernel(y_ref, scale_ref, shift_ref, o_ref):
    """Pass 2: element-wise folded BN affine on the stored conv result."""
    y = y_ref[...].astype(jnp.float32)
    o_ref[...] = (y * scale_ref[...] + shift_ref[...]).astype(o_ref.dtype)


def _extract_patches(x_nchw, k, stride, padding):
    """im2col: (N*H_out*W_out, C*k*k), inner order (C, kh, kw) to match PyTorch weights."""
    n, c, h, w = x_nchw.shape
    xp = jnp.pad(x_nchw, ((0, 0), (0, 0), (padding, padding), (padding, padding)))
    h_out = (h + 2 * padding - k) // stride + 1
    w_out = (w + 2 * padding - k) // stride + 1

    slices = []
    for kh in range(k):
        for kw in range(k):
            sl = xp[:, :, kh: kh + stride * h_out: stride,
                          kw: kw + stride * w_out: stride]      # (N, C, Ho, Wo)
            slices.append(sl)
    patches = jnp.stack(slices, axis=0)                          # (k*k, N, C, Ho, Wo)
    patches = jnp.transpose(patches, (1, 3, 4, 2, 0))            # (N, Ho, Wo, C, k*k)
    patches = patches.reshape(n * h_out * w_out, c * k * k)
    return patches, h_out, w_out


def conv2d_batchnorm(x_nchw, weight, bias, gamma, beta, *, stride, padding, tile_m=1024):
    """Forward of Conv2DBatchNorm (Conv2d(bias=True) -> BatchNorm2d, training mode). NCHW.

    `bias` is accepted for interface parity but intentionally not added: a per-channel
    constant before training-mode BN is exactly cancelled by the mean subtraction (it would
    only matter for running statistics, which this forward does not produce).
    """
    del bias  # mathematically a no-op on the normalized output
    n, c, h, w = x_nchw.shape
    f, c_w, k, _ = weight.shape
    assert c_w == c

    # im2col built directly in bf16 (MXU operand dtype) — no f32 pad/cast round trip.
    patches, h_out, w_out = _extract_patches(x_nchw.astype(jnp.bfloat16), k, stride, padding)
    m_true, k_dim = patches.shape

    # F padded to a lane multiple (128); 128 < F <= 256 therefore lands on 256, the full
    # v6e/v7x MXU output width.  K is deliberately left unpadded (full-extent block dim).
    f_pad = _round_up(f, 128)

    # Row-tile sizing: multiple of 256 (MXU M side, bf16 sublane packing), largest that fits
    # the per-generation VMEM budget.
    fit_budget, vmem_limit = _vmem_limits()
    tm_cap = _round_up(min(tile_m, m_true), 256)
    tm = 256
    for cand in (1024, 768, 512):
        if cand <= tm_cap and _tile_footprint(cand, k_dim, f_pad) <= fit_budget:
            tm = cand
            break
    tm = min(tm, tm_cap)
    # TODO(synk): if even tm=256 plus the resident (K, F_pad) weight exceeds the VMEM budget
    # (very large K on v7x), add a K grid axis ("arbitrary") with an f32 VMEM accumulator
    # instead of keeping the whole weight resident.

    n_tiles = pl.cdiv(m_true, tm)
    n_cores = 2 if n_tiles >= 2 else 1         # split pass-1 stats across v7x's 2 TCs
    tiles_per_core = pl.cdiv(n_tiles, n_cores)
    total_tiles = n_cores * tiles_per_core
    m_pad = total_tiles * tm

    # Zero-padded M rows contribute 0 to both sum and sum(y^2), so the stats stay exact.
    patches_p = jnp.pad(patches, ((0, m_pad - m_true), (0, 0)))                     # bf16
    w_mat = jnp.pad(weight.reshape(f, k_dim).T,
                    ((0, 0), (0, f_pad - f))).astype(jnp.bfloat16)                  # (K, F_pad)

    patch_spec = pl.BlockSpec((tm, k_dim), lambda cc, t: (cc * tiles_per_core + t, 0))
    weight_spec = pl.BlockSpec((k_dim, f_pad), lambda cc, t: (0, 0))   # VMEM-resident weight
    y_spec = pl.BlockSpec((tm, f_pad), lambda cc, t: (cc * tiles_per_core + t, 0))
    stats_spec = pl.BlockSpec((8, f_pad), lambda cc, t: (cc, 0))       # per-core partial stats

    # ---- Pass 1: conv matmul (bf16 in / f32 acc), emit y (bf16) + per-core partial stats.
    y_flat, stats = pl.pallas_call(
        _conv_stats_kernel,
        out_shape=(jax.ShapeDtypeStruct((m_pad, f_pad), jnp.bfloat16),
                   jax.ShapeDtypeStruct((n_cores * 8, f_pad), jnp.float32)),
        grid_spec=pltpu.PrefetchScalarGridSpec(
            num_scalar_prefetch=0,
            grid=(n_cores, tiles_per_core),
            in_specs=[patch_spec, weight_spec],
            out_specs=(y_spec, stats_spec),
        ),
        compiler_params=pltpu.CompilerParams(
            dimension_semantics=("parallel", "arbitrary"),
            vmem_limit_bytes=vmem_limit),
        cost_estimate=pl.CostEstimate(
            flops=2 * m_pad * k_dim * f_pad, transcendentals=0,
            bytes_accessed=(patches_p.size * 2 + w_mat.size * 2
                            + m_pad * f_pad * 2 + n_cores * 8 * f_pad * 4)),
    )(patches_p, w_mat)

    # ---- Tiny (F,)-sized statistics math + affine folding (wrapper side, f32).
    stats = stats.reshape(n_cores, 8, f_pad)
    sum_y = jnp.sum(stats[:, 0, :], axis=0)
    sum_sq = jnp.sum(stats[:, 1, :], axis=0)
    mean = sum_y / m_true
    var = jnp.maximum(sum_sq / m_true - mean * mean, 0.0)   # biased var (training-mode BN)
    # TODO(synk): one-pass variance (E[y^2] - mean^2) can cancel when |mean| >> std; switch to
    #             a shifted / two-pass variance if tolerances tighten.
    inv_std = jax.lax.rsqrt(var + BN_EPS)
    gamma_p = jnp.pad(gamma.astype(jnp.float32), (0, f_pad - f))
    beta_p = jnp.pad(beta.astype(jnp.float32), (0, f_pad - f))
    scale = (gamma_p * inv_std).reshape(1, f_pad)
    shift = (beta_p - mean * gamma_p * inv_std).reshape(1, f_pad)

    # ---- Pass 2: pure element-wise y*scale + shift (no matmul recompute), lane-dense stores.
    out_flat = pl.pallas_call(
        _bn_affine_kernel,
        out_shape=jax.ShapeDtypeStruct((m_pad, f_pad), x_nchw.dtype),
        grid_spec=pltpu.PrefetchScalarGridSpec(
            num_scalar_prefetch=0,
            grid=(total_tiles,),
            in_specs=[pl.BlockSpec((tm, f_pad), lambda i: (i, 0)),
                      pl.BlockSpec((1, f_pad), lambda i: (0, 0)),
                      pl.BlockSpec((1, f_pad), lambda i: (0, 0))],
            out_specs=pl.BlockSpec((tm, f_pad), lambda i: (i, 0)),
        ),
        compiler_params=pltpu.CompilerParams(
            dimension_semantics=("parallel",),
            vmem_limit_bytes=vmem_limit),
        cost_estimate=pl.CostEstimate(
            flops=2 * m_pad * f_pad, transcendentals=0,
            bytes_accessed=m_pad * f_pad * 2 + m_pad * f_pad * 4 + 2 * f_pad * 4),
    )(y_flat, scale, shift)

    out = out_flat[:m_true, :f].reshape(n, h_out, w_out, f)
    # TODO(synk): the NHWC->NCHW transpose below is an extra full-activation HBM round trip
    #             outside the kernel; expose an NHWC output (or fuse into the consumer) where
    #             the PyTorch NCHW convention is not required.
    return jnp.transpose(out, (0, 3, 1, 2))


if __name__ == "__main__":
    # Module config: Conv2DBatchNorm(in_channels=4, n_filters=8, k_size=3, stride=1,
    #                                padding=1, bias=True)
    in_channels, n_filters, k_size, stride, padding = 4, 8, 3, 1, 1
    N, H, W = 2, 16, 16

    key = jax.random.PRNGKey(0)
    kx, kw, kb, kg, kbeta = jax.random.split(key, 5)

    x = jax.random.normal(kx, (N, in_channels, H, W), dtype=jnp.float32)
    weight = jax.random.normal(
        kw, (n_filters, in_channels, k_size, k_size), dtype=jnp.float32) * 0.1
    bias = jax.random.normal(kb, (n_filters,), dtype=jnp.float32) * 0.1
    gamma = 1.0 + 0.1 * jax.random.normal(kg, (n_filters,), dtype=jnp.float32)
    beta = 0.1 * jax.random.normal(kbeta, (n_filters,), dtype=jnp.float32)

    out = conv2d_batchnorm(x, weight, bias, gamma, beta, stride=stride, padding=padding)
    out = jax.block_until_ready(out)
    assert out.shape == (N, n_filters, H, W), out.shape

    # Reference: f32 XLA conv (+ bias) followed by training-mode BatchNorm2d.  Also verifies
    # that dropping the conv bias inside the kernel is exact (BN mean subtraction cancels it).
    conv_ref = jax.lax.conv_general_dilated(
        x, weight, window_strides=(stride, stride),
        padding=[(padding, padding), (padding, padding)],
        dimension_numbers=("NCHW", "OIHW", "NCHW"),
        precision=jax.lax.Precision.HIGHEST) + bias[None, :, None, None]
    mu = conv_ref.mean(axis=(0, 2, 3), keepdims=True)
    var = ((conv_ref - mu) ** 2).mean(axis=(0, 2, 3), keepdims=True)
    ref = (conv_ref - mu) * jax.lax.rsqrt(var + BN_EPS) \
        * gamma[None, :, None, None] + beta[None, :, None, None]

    err = float(jnp.max(jnp.abs(out - ref)))
    assert err < 0.15, f"max abs err {err} (bf16 MXU operands / bf16 y, f32 accumulation)"
    print("KERNEL_OK")
</pallas_src>

<mosaic_0001>
module attributes {stable_mosaic.version = 11 : i64} {
  func.func @_conv_stats_kernel(%arg0: i32, %arg1: i32, %arg2: memref<512x36xbf16, #tpu.memory_space<vmem>>, %arg3: memref<36x128xbf16, #tpu.memory_space<vmem>>, %arg4: memref<512x128xbf16, #tpu.memory_space<vmem>>, %arg5: memref<8x128xf32, #tpu.memory_space<vmem>>) attributes {dimension_semantics = [#tpu.dimension_semantics<parallel>, #tpu.dimension_semantics<arbitrary>], iteration_bounds = array<i64: 1, 1>, scalar_prefetch = 0 : i64, scratch_operands = 0 : i64, tpu.core_type = #tpu.core_type<tc>, window_params = [{transform_indices = @transform_0, window_bounds = array<i64: 512, 36>}, {pipeline_mode = #tpu.pipeline_mode<synchronous>, transform_indices = @transform_1, window_bounds = array<i64: 36, 128>}, {transform_indices = @transform_2, window_bounds = array<i64: 512, 128>}, {transform_indices = @transform_3, window_bounds = array<i64: 8, 128>}]} {
    %c0_i32 = arith.constant 0 : i32
    %0 = arith.cmpi eq, %arg1, %c0_i32 : i32
    %1 = arith.extui %0 : i1 to i32
    %c0_i32_0 = arith.constant 0 : i32
    %2 = arith.cmpi ne, %1, %c0_i32_0 : i32
    scf.if %2 {
      %cst_12 = arith.constant 0.000000e+00 : f32
      %17 = vector.broadcast %cst_12 : f32 to vector<8x128xf32>
      %c0_13 = arith.constant 0 : index
      %c0_14 = arith.constant 0 : index
      %18 = vector.load %arg5[%c0_13, %c0_14] : memref<8x128xf32, #tpu.memory_space<vmem>>, vector<8x128xf32>
      tpu.vector_store %arg5[%c0_13, %c0_14], %17 {strides = array<i32>} : memref<8x128xf32, #tpu.memory_space<vmem>>, vector<8x128xf32>,
    } else {
    }
    %c0 = arith.constant 0 : index
    %c0_1 = arith.constant 0 : index
    %3 = vector.load %arg2[%c0, %c0_1] : memref<512x36xbf16, #tpu.memory_space<vmem>>, vector<512x36xbf16>
    %c0_2 = arith.constant 0 : index
    %c0_3 = arith.constant 0 : index
    %4 = vector.load %arg3[%c0_2, %c0_3] : memref<36x128xbf16, #tpu.memory_space<vmem>>, vector<36x128xbf16>
    %cst = arith.constant dense<0.000000e+00> : vector<512x128xf32>
    %5 = tpu.matmul %3, %4, %cst {dimension_numbers = #tpu.dot_dimension_numbers<[1], [0], [0], [1], [0, 0, 1, 1], [], []>} : vector<512x36xbf16>, vector<36x128xbf16>, vector<512x128xf32> -> vector<512x128xf32>
    %6 = arith.truncf %5 : vector<512x128xf32> to vector<512x128xbf16>
    %c0_4 = arith.constant 0 : index
    %c0_5 = arith.constant 0 : index
    %7 = vector.load %arg4[%c0_4, %c0_5] : memref<512x128xbf16, #tpu.memory_space<vmem>>, vector<512x128xbf16>
    tpu.vector_store %arg4[%c0_4, %c0_5], %6 {strides = array<i32>} : memref<512x128xbf16, #tpu.memory_space<vmem>>, vector<512x128xbf16>,
    %cst_6 = arith.constant dense<0.000000e+00> : vector<128xf32>
    %8 = vector.multi_reduction <add>, %5, %cst_6 [0] : vector<512x128xf32> to vector<128xf32>
    %9 = vector.shape_cast %8 : vector<128xf32> to vector<1x128xf32>
    %10 = arith.mulf %5, %5 : vector<512x128xf32>
    %cst_7 = arith.constant dense<0.000000e+00> : vector<128xf32>
    %11 = vector.multi_reduction <add>, %10, %cst_7 [0] : vector<512x128xf32> to vector<128xf32>
    %12 = vector.shape_cast %11 : vector<128xf32> to vector<1x128xf32>
    %13 = tpu.concatenate %9, %12 in 0 : vector<1x128xf32>, vector<1x128xf32> -> vector<2x128xf32>
    %c0_8 = arith.constant 0 : index
    %c0_9 = arith.constant 0 : index
    %14 = vector.load %arg5[%c0_8, %c0_9] : memref<8x128xf32, #tpu.memory_space<vmem>>, vector<2x128xf32>
    %15 = arith.addf %14, %13 : vector<2x128xf32>
    %c0_10 = arith.constant 0 : index
    %c0_11 = arith.constant 0 : index
    %16 = vector.load %arg5[%c0_10, %c0_11] : memref<8x128xf32, #tpu.memory_space<vmem>>, vector<2x128xf32>
    tpu.vector_store %arg5[%c0_10, %c0_11], %15 {strides = array<i32>} : memref<8x128xf32, #tpu.memory_space<vmem>>, vector<2x128xf32>,
    return
  }
  func.func @transform_0(%arg0: i32, %arg1: i32) -> (i32, i32) {
    %c1_i32 = arith.constant 1 : i32
    %0 = arith.muli %arg0, %c1_i32 : i32
    %1 = arith.addi %0, %arg1 : i32
    %c0_i32 = arith.constant 0 : i32
    %c0_i32_0 = arith.constant 0 : i32
    return %1, %c0_i32 : i32, i32
  }
  func.func @transform_1(%arg0: i32, %arg1: i32) -> (i32, i32) {
    %c0_i32 = arith.constant 0 : i32
    %c0_i32_0 = arith.constant 0 : i32
    %c0_i32_1 = arith.constant 0 : i32
    return %c0_i32, %c0_i32_0 : i32, i32
  }
  func.func @transform_2(%arg0: i32, %arg1: i32) -> (i32, i32) {
    %c1_i32 = arith.constant 1 : i32
    %0 = arith.muli %arg0, %c1_i32 : i32
    %1 = arith.addi %0, %arg1 : i32
    %c0_i32 = arith.constant 0 : i32
    %c0_i32_0 = arith.constant 0 : i32
    return %1, %c0_i32 : i32, i32
  }
  func.func @transform_3(%arg0: i32, %arg1: i32) -> (i32, i32) {
    %c0_i32 = arith.constant 0 : i32
    %c0_i32_0 = arith.constant 0 : i32
    return %arg0, %c0_i32 : i32, i32
  }
}

</mosaic_0001>

<llo_original>
// kernel: tpu_custom_call.1
$region0: #{tpu_custom_call.1}
  #allocation0 [shape = 'u32[]', space=smem, size = 0x4, offset = 0x4, fixed_abs, tag = 'smem constant byte address 0x4 - core index']
  #allocation1 [shape = 'u32[144,128]{1,0:T(1,128)}', space=vmem, size = 0x12000, scoped, tag = 'internal scratch']
  %s0 = inlined_call_operand.vmem [shape: bf16[512,36], index: 0, kind: input, shape index: {}]
  %s1 = inlined_call_operand.vmem [shape: bf16[36,128], index: 1, kind: input, shape index: {}]
  %s2 = inlined_call_operand.hbm [shape: bf16[512,128], index: 2, kind: output, shape index: {0}]
  %s3 = inlined_call_operand.hbm [shape: f32[8,128], index: 3, kind: output, shape index: {1}]
  %4 = xla_tuple %s2, %s3
  %s5 = sld [smem:[#allocation0]]
  $region30: #{tpu_custom_call.1} parent=0
    _
  %s7 = ssub.s32 1, %s5
  %s8 = scalar_select 0, %s7, %s5
  $region1: #{tpu_custom_call.1} parent=0
    #allocation2 [shape = 'u8[131072]{0}', space=vmem, size = 0x20000, scoped, tag = 'output window, operand 0, single buffered']
    #allocation3 [shape = 's32[1]{0}', space=sflag, size = 0x4, scoped, tag = 'scoped memory for tpu_custom_call.1']
    #allocation4 [shape = 'u8[4096]{0}', space=vmem, size = 0x1000, scoped, tag = 'output window, operand 1, single buffered']
    #allocation5 [shape = 's32[1]{0}', space=sflag, size = 0x4, scoped, tag = 'scoped memory for tpu_custom_call.1']
    %9 = vsyncpa [#allocation3], 0
    %10 = vsyncpa [#allocation5], 0
    // Predicated region
    $region2: #{tpu_custom_call.1} parent=1 // pred_check
      _
    $region3: #{tpu_custom_call.1} parent=1 // pred_check_branch
      %12 = sbr.rel (0) target = $region5
    $region4: #{tpu_custom_call.1} parent=1 // pred_region
      %s13 = sadd.s32 0, 0
      %s14 = smul.u32 64, %s13
      %p15 = scmp.lt.s32.totalorder %s14, 63
      %s16 = scalar_select %p15, %s14, 63
      %s17 = smul.addr %s16, 4
      %s18 = scalar_lea.vmem %s0, %s17
      %s19 = sadd.s32 0, 0
      %s20 = smul.u32 64, %s19
    $region5: #{tpu_custom_call.1} parent=1 // pred_fallthru
      _
    // Predicated region
    $region6: #{tpu_custom_call.1} parent=1 // pred_check
      _
    $region7: #{tpu_custom_call.1} parent=1 // pred_check_branch
      %22 = sbr.rel (0) target = $region9
    $region8: #{tpu_custom_call.1} parent=1 // pred_region
      _
    $region9: #{tpu_custom_call.1} parent=1 // pred_fallthru
      _
    %s23 = sadd.s32 0, 0
    %s24 = smul.u32 64, %s23
    %p25 = scmp.lt.s32.totalorder %s24, 63
    %s26 = scalar_select %p25, %s24, 63
    %s27 = smul.addr %s26, 4
    %s28 = scalar_lea.vmem %s0, %s27
    %s29 = sadd.s32 0, 0
    %s30 = smul.u32 64, %s29
    %p31 = scmp.lt.s32.totalorder %s30, 63
    %s32 = scalar_select %p31, %s30, 63
    %s33 = smul.addr %s32, 4
    %s34 = scalar_lea.vmem %s0, %s33
    %s35 = sadd.s32 0, 0
    %s36 = smul.u32 64, %s35
    %s37 = sadd.s32 0, 0
    %s38 = smul.u32 64, %s37
    %p40 = scmp.eq.s32.totalorder 0, 0
    // Predicated region
    $region10: #{tpu_custom_call.1} parent=1 // pred_check
      %p41 = pneg %p40
    $region11: #{tpu_custom_call.1} parent=1 // pred_check_branch
      %43 = sbr.rel (%p41) target = $region13
    $region12: #{tpu_custom_call.1} parent=1 // pred_region
      %44 = vst [vmem:[#allocation4] sm:$0xff] 0.0
    $region13: #{tpu_custom_call.1} parent=1 // pred_fallthru
      _
    %v45 = vld [vmem:[%s34] sm:$0xf]
    %v46 = vld [vmem:[%s34 + $0x4] sm:$0xf]
    %v47 = vld [vmem:[%s34 + $0x8] sm:$0xf]
    %v48 = vld [vmem:[%s34 + $0xc] sm:$0xf]
    %v49 = vld [vmem:[%s34 + $0x10] sm:$0xf]
    %v50 = vld [vmem:[%s34 + $0x14] sm:$0xf]
    %v51 = vld [vmem:[%s34 + $0x18] sm:$0xf]
    %v52 = vld [vmem:[%s34 + $0x1c] sm:$0xf]
    %v53 = vld [vmem:[%s34 + $0x20] sm:$0xf]
    %v54 = vld [vmem:[%s34 + $0x24] sm:$0xf]
    %v55 = vld [vmem:[%s34 + $0x28] sm:$0xf]
    %v56 = vld [vmem:[%s34 + $0x2c] sm:$0xf]
    %v57 = vld [vmem:[%s34 + $0x30] sm:$0xf]
    %v58 = vld [vmem:[%s34 + $0x34] sm:$0xf]
    %v59 = vld [vmem:[%s34 + $0x38] sm:$0xf]
    %v60 = vld [vmem:[%s34 + $0x3c] sm:$0xf]
    %v61 = vld [vmem:[%s34 + $0x40] sm:$0xf]
    %v62 = vld [vmem:[%s34 + $0x44] sm:$0xf]
    %v63 = vld [vmem:[%s34 + $0x48] sm:$0xf]
    %v64 = vld [vmem:[%s34 + $0x4c] sm:$0xf]
    %v65 = vld [vmem:[%s34 + $0x50] sm:$0xf]
    %v66 = vld [vmem:[%s34 + $0x54] sm:$0xf]
    %v67 = vld [vmem:[%s34 + $0x58] sm:$0xf]
    %v68 = vld [vmem:[%s34 + $0x5c] sm:$0xf]
    %v69 = vld [vmem:[%s34 + $0x60] sm:$0xf]
    %v70 = vld [vmem:[%s34 + $0x64] sm:$0xf]
    %v71 = vld [vmem:[%s34 + $0x68] sm:$0xf]
    %v72 = vld [vmem:[%s34 + $0x6c] sm:$0xf]
    %v73 = vld [vmem:[%s34 + $0x70] sm:$0xf]
    %v74 = vld [vmem:[%s34 + $0x74] sm:$0xf]
    %v75 = vld [vmem:[%s34 + $0x78] sm:$0xf]
    %v76 = vld [vmem:[%s34 + $0x7c] sm:$0xf]
    %v77 = vld [vmem:[%s34 + $0x80] sm:$0xf]
    %v78 = vld [vmem:[%s34 + $0x84] sm:$0xf]
    %v79 = vld [vmem:[%s34 + $0x88] sm:$0xf]
    %v80 = vld [vmem:[%s34 + $0x8c] sm:$0xf]
    %v81 = vld [vmem:[%s34 + $0x90] sm:$0xf]
    %v82 = vld [vmem:[%s34 + $0x94] sm:$0xf]
    %v83 = vld [vmem:[%s34 + $0x98] sm:$0xf]
    %v84 = vld [vmem:[%s34 + $0x9c] sm:$0xf]
    %v85 = vld [vmem:[%s34 + $0xa0] sm:$0xf]
    %v86 = vld [vmem:[%s34 + $0xa4] sm:$0xf]
    %v87 = vld [vmem:[%s34 + $0xa8] sm:$0xf]
    %v88 = vld [vmem:[%s34 + $0xac] sm:$0xf]
    %v89 = vld [vmem:[%s34 + $0xb0] sm:$0xf]
    %v90 = vld [vmem:[%s34 + $0xb4] sm:$0xf]
    %v91 = vld [vmem:[%s34 + $0xb8] sm:$0xf]
    %v92 = vld [vmem:[%s34 + $0xbc] sm:$0xf]
    %v93 = vld [vmem:[%s34 + $0xc0] sm:$0xf]
    %v94 = vld [vmem:[%s34 + $0xc4] sm:$0xf]
    %v95 = vld [vmem:[%s34 + $0xc8] sm:$0xf]
    %v96 = vld [vmem:[%s34 + $0xcc] sm:$0xf]
    %v97 = vld [vmem:[%s34 + $0xd0] sm:$0xf]
    %v98 = vld [vmem:[%s34 + $0xd4] sm:$0xf]
    %v99 = vld [vmem:[%s34 + $0xd8] sm:$0xf]
    %v100 = vld [vmem:[%s34 + $0xdc] sm:$0xf]
    %v101 = vld [vmem:[%s34 + $0xe0] sm:$0xf]
    %v102 = vld [vmem:[%s34 + $0xe4] sm:$0xf]
    %v103 = vld [vmem:[%s34 + $0xe8] sm:$0xf]
    %v104 = vld [vmem:[%s34 + $0xec] sm:$0xf]
    %v105 = vld [vmem:[%s34 + $0xf0] sm:$0xf]
    %v106 = vld [vmem:[%s34 + $0xf4] sm:$0xf]
    %v107 = vld [vmem:[%s34 + $0xf8] sm:$0xf]
    %v108 = vld [vmem:[%s34 + $0xfc] sm:$0xf]
    %v109 = vld [vmem:[%s1] sm:$0xf]
    %v110 = vld [vmem:[%s1 + $0x4] sm:$0xf]
    %v111 = vld [vmem:[%s1 + $0x8] sm:$0xf]
    %v112 = vld [vmem:[%s1 + $0xc] sm:$0xf]
    %v113 = vld [vmem:[%s1 + $0x10] sm:$0x3]
    %v178 = vunpack.c.l.b16 %v45
    %v179 = vunpack.c.l.b16 %v46
    %v180 = vunpack.c.l.b16 %v47
    %v181 = vunpack.c.l.b16 %v48
    %v182 = vunpack.c.l.b16 %v49
    %v183 = vunpack.c.l.b16 %v50
    %v184 = vunpack.c.l.b16 %v51
    %v185 = vunpack.c.l.b16 %v52
    %v186 = vunpack.c.l.b16 %v53
    %v187 = vunpack.c.l.b16 %v54
    %v188 = vunpack.c.l.b16 %v55
    %v189 = vunpack.c.l.b16 %v56
    %v190 = vunpack.c.l.b16 %v57
    %v191 = vunpack.c.l.b16 %v58
    %v192 = vunpack.c.l.b16 %v59
    %v193 = vunpack.c.l.b16 %v60
    %v194 = vunpack.c.l.b16 %v61
    %v195 = vunpack.c.l.b16 %v62
    %v196 = vunpack.c.l.b16 %v63
    %v197 = vunpack.c.l.b16 %v64
    %v198 = vunpack.c.l.b16 %v65
    %v199 = vunpack.c.l.b16 %v66
    %v200 = vunpack.c.l.b16 %v67
    %v201 = vunpack.c.l.b16 %v68
    %v202 = vunpack.c.l.b16 %v69
    %v203 = vunpack.c.l.b16 %v70
    %v204 = vunpack.c.l.b16 %v71
    %v205 = vunpack.c.l.b16 %v72
    %v206 = vunpack.c.l.b16 %v73
    %v207 = vunpack.c.l.b16 %v74
    %v208 = vunpack.c.l.b16 %v75
    %v209 = vunpack.c.l.b16 %v76
    %v210 = vunpack.c.l.b16 %v77
    %v211 = vunpack.c.l.b16 %v78
    %v212 = vunpack.c.l.b16 %v79
    %v213 = vunpack.c.l.b16 %v80
    %v214 = vunpack.c.l.b16 %v81
    %v215 = vunpack.c.l.b16 %v82
    %v216 = vunpack.c.l.b16 %v83
    %v217 = vunpack.c.l.b16 %v84
    %v218 = vunpack.c.l.b16 %v85
    %v219 = vunpack.c.l.b16 %v86
    %v220 = vunpack.c.l.b16 %v87
    %v221 = vunpack.c.l.b16 %v88
    %v222 = vunpack.c.l.b16 %v89
    %v223 = vunpack.c.l.b16 %v90
    %v224 = vunpack.c.l.b16 %v91
    %v225 = vunpack.c.l.b16 %v92
    %v226 = vunpack.c.l.b16 %v93
    %v227 = vunpack.c.l.b16 %v94
    %v228 = vunpack.c.l.b16 %v95
    %v229 = vunpack.c.l.b16 %v96
    %v230 = vunpack.c.l.b16 %v97
    %v231 = vunpack.c.l.b16 %v98
    %v232 = vunpack.c.l.b16 %v99
    %v233 = vunpack.c.l.b16 %v100
    %v234 = vunpack.c.l.b16 %v101
    %v235 = vunpack.c.l.b16 %v102
    %v236 = vunpack.c.l.b16 %v103
    %v237 = vunpack.c.l.b16 %v104
    %v238 = vunpack.c.l.b16 %v105
    %v239 = vunpack.c.l.b16 %v106
    %v240 = vunpack.c.l.b16 %v107
    %v241 = vunpack.c.l.b16 %v108
    %v242 = vpack.c.b16 %v179, %v178
    %v243 = vpack.c.b16 %v181, %v180
    %v244 = vpack.c.b16 %v183, %v182
    %v245 = vpack.c.b16 %v185, %v184
    %v246 = vpack.c.b16 %v187, %v186
    %v247 = vpack.c.b16 %v189, %v188
    %v248 = vpack.c.b16 %v191, %v190
    %v249 = vpack.c.b16 %v193, %v192
    %v250 = vpack.c.b16 %v195, %v194
    %v251 = vpack.c.b16 %v197, %v196
    %v252 = vpack.c.b16 %v199, %v198
    %v253 = vpack.c.b16 %v201, %v200
    %v254 = vpack.c.b16 %v203, %v202
    %v255 = vpack.c.b16 %v205, %v204
    %v256 = vpack.c.b16 %v207, %v206
    %v257 = vpack.c.b16 %v209, %v208
    %v258 = vpack.c.b16 %v211, %v210
    %v259 = vpack.c.b16 %v213, %v212
    %v260 = vpack.c.b16 %v215, %v214
    %v261 = vpack.c.b16 %v217, %v216
    %v262 = vpack.c.b16 %v219, %v218
    %v263 = vpack.c.b16 %v221, %v220
    %v264 = vpack.c.b16 %v223, %v222
    %v265 = vpack.c.b16 %v225, %v224
    %v266 = vpack.c.b16 %v227, %v226
    %v267 = vpack.c.b16 %v229, %v228
    %v268 = vpack.c.b16 %v231, %v230
    %v269 = vpack.c.b16 %v233, %v232
    %v270 = vpack.c.b16 %v235, %v234
    %v271 = vpack.c.b16 %v237, %v236
    %v272 = vpack.c.b16 %v239, %v238
    %v273 = vpack.c.b16 %v241, %v240
    %v279 = vunpack.c.l.b16 %v109
    %v280 = vunpack.c.l.b16 %v110
    %v281 = vunpack.c.l.b16 %v111
    %v282 = vunpack.c.l.b16 %v112
    %v283 = vunpack.c.l.b16 %v113
    %v284 = vpack.c.b16 %v280, %v279
    %v285 = vpack.c.b16 %v282, %v281
    %v286 = vpack.c.b16 %v283, %v283
    %vm289 = vcmask 293888
    %v291 = vsel %vm289, %v242, 0
    %v294 = vsel %vm289, %v243, 0
    %v297 = vsel %vm289, %v244, 0
    %v300 = vsel %vm289, %v245, 0
    %v303 = vsel %vm289, %v246, 0
    %v306 = vsel %vm289, %v247, 0
    %v309 = vsel %vm289, %v248, 0
    %v312 = vsel %vm289, %v249, 0
    %v315 = vsel %vm289, %v250, 0
    %v318 = vsel %vm289, %v251, 0
    %v321 = vsel %vm289, %v252, 0
    %v324 = vsel %vm289, %v253, 0
    %v327 = vsel %vm289, %v254, 0
    %v330 = vsel %vm289, %v255, 0
    %v333 = vsel %vm289, %v256, 0
    %v336 = vsel %vm289, %v257, 0
    %v339 = vsel %vm289, %v258, 0
    %v342 = vsel %vm289, %v259, 0
    %v345 = vsel %vm289, %v260, 0
    %v348 = vsel %vm289, %v261, 0
    %v351 = vsel %vm289, %v262, 0
    %v354 = vsel %vm289, %v263, 0
    %v357 = vsel %vm289, %v264, 0
    %v360 = vsel %vm289, %v265, 0
    %v363 = vsel %vm289, %v266, 0
    %v366 = vsel %vm289, %v267, 0
    %v369 = vsel %vm289, %v268, 0
    %v372 = vsel %vm289, %v269, 0
    %v375 = vsel %vm289, %v270, 0
    %v378 = vsel %vm289, %v271, 0
    %v381 = vsel %vm289, %v272, 0
    %v384 = vsel %vm289, %v273, 0
    %vm386 = vcmask 1041408
    %v388 = vsel %vm386, %v286, 0
    %390 = vmatprep.subr.bf16.mxu0 0
    %391 = vmatpush1.bf16.msra.mxu0 0
    %392 = vmatprep.subr.bf16.mxu0 0
    %393 = vmatpush1.bf16.msra.mxu0 0
    %394 = vmatprep.subr.bf16.mxu0 0
    %395 = vmatpush1.bf16.msra.mxu0 0
    %396 = vmatprep.subr.bf16.mxu0 0
    %397 = vmatpush1.bf16.msra.mxu0 0
    %398 = vmatprep.subr.bf16.mxu0 0
    %399 = vmatpush1.bf16.msra.mxu0 0
    %400 = vmatprep.subr.bf16.mxu0 0
    %401 = vmatpush1.bf16.msra.mxu0 %v388
    %402 = vmatprep.subr.bf16.mxu0 0
    %403 = vmatpush1.bf16.msra.mxu0 %v285
    %404 = vmatprep.subr.bf16.mxu0 0
    %405 = vmatpush1.bf16.msra.mxu0 %v284
    %406 = vmatprep.subr.bf16.mxu0 0
    %407 = vmatpush2.bf16.msra.mxu0 0
    %408 = vmatprep.subr.bf16.mxu0 0
    %409 = vmatpush2.bf16.msra.mxu0 0
    %410 = vmatprep.subr.bf16.mxu0 0
    %411 = vmatpush2.bf16.msra.mxu0 0
    %412 = vmatprep.subr.bf16.mxu0 0
    %413 = vmatpush2.bf16.msra.mxu0 0
    %414 = vmatprep.subr.bf16.mxu0 0
    %415 = vmatpush2.bf16.msra.mxu0 0
    %416 = vmatprep.subr.bf16.mxu0 0
    %417 = vmatpush2.bf16.msra.mxu0 0
    %418 = vmatprep.subr.bf16.mxu0 0
    %419 = vmatpush2.bf16.msra.mxu0 0
    %420 = vmatprep.subr.bf16.mxu0 0
    %421 = vmatpush2.bf16.msra.mxu0 0
    %422 = vmatprep.mubr.bf16.mxu0 0
    %423 = vmatmul.mubr.bf16.gmra.mxu0 %v291
    %v424 = vpop.f32.mrf.mxu0
    %v425 = vadd.f32 0.0, %v424
    %v426 = vpop.f32.mrf.mxu0
    %v427 = vpop.f32.mrf.mxu0
    %v428 = vadd.f32 0.0, %v427
    %v429 = vpop.f32.mrf.mxu0
    %430 = vmatprep.mubr.bf16.mxu0 0
    %431 = vmatmul.mubr.bf16.gmra.mxu0 %v294
    %v432 = vpop.f32.mrf.mxu0
    %v433 = vadd.f32 0.0, %v432
    %v434 = vpop.f32.mrf.mxu0
    %v435 = vpop.f32.mrf.mxu0
    %v436 = vadd.f32 0.0, %v435
    %v437 = vpop.f32.mrf.mxu0
    %438 = vmatprep.mubr.bf16.mxu0 0
    %439 = vmatmul.mubr.bf16.gmra.mxu0 %v297
    %v440 = vpop.f32.mrf.mxu0
    %v441 = vadd.f32 0.0, %v440
    %v442 = vpop.f32.mrf.mxu0
    %v443 = vpop.f32.mrf.mxu0
    %v444 = vadd.f32 0.0, %v443
    %v445 = vpop.f32.mrf.mxu0
    %446 = vmatprep.mubr.bf16.mxu0 0
    %447 = vmatmul.mubr.bf16.gmra.mxu0 %v300
    %v448 = vpop.f32.mrf.mxu0
    %v449 = vadd.f32 0.0, %v448
    %v450 = vpop.f32.mrf.mxu0
    %v451 = vpop.f32.mrf.mxu0
    %v452 = vadd.f32 0.0, %v451
    %v453 = vpop.f32.mrf.mxu0
    %454 = vmatprep.mubr.bf16.mxu0 0
    %455 = vmatmul.mubr.bf16.gmra.mxu0 %v303
    %v456 = vpop.f32.mrf.mxu0
    %v457 = vadd.f32 0.0, %v456
    %v458 = vpop.f32.mrf.mxu0
    %v459 = vpop.f32.mrf.mxu0
    %v460 = vadd.f32 0.0, %v459
    %v461 = vpop.f32.mrf.mxu0
    %462 = vmatprep.mubr.bf16.mxu0 0
    %463 = vmatmul.mubr.bf16.gmra.mxu0 %v306
    %v464 = vpop.f32.mrf.mxu0
    %v465 = vadd.f32 0.0, %v464
    %v466 = vpop.f32.mrf.mxu0
    %v467 = vpop.f32.mrf.mxu0
    %v468 = vadd.f32 0.0, %v467
    %v469 = vpop.f32.mrf.mxu0
    %470 = vmatprep.mubr.bf16.mxu0 0
    %471 = vmatmul.mubr.bf16.gmra.mxu0 %v309
    %v472 = vpop.f32.mrf.mxu0
    %v473 = vadd.f32 0.0, %v472
    %v474 = vpop.f32.mrf.mxu0
    %v475 = vpop.f32.mrf.mxu0
    %v476 = vadd.f32 0.0, %v475
    %v477 = vpop.f32.mrf.mxu0
    %478 = vmatprep.mubr.bf16.mxu0 0
    %479 = vmatmul.mubr.bf16.gmra.mxu0 %v312
    %v480 = vpop.f32.mrf.mxu0
    %v481 = vadd.f32 0.0, %v480
    %v482 = vpop.f32.mrf.mxu0
    %v483 = vpop.f32.mrf.mxu0
    %v484 = vadd.f32 0.0, %v483
    %v485 = vpop.f32.mrf.mxu0
    %486 = vmatprep.mubr.bf16.mxu0 0
    %487 = vmatmul.mubr.bf16.gmra.mxu0 %v315
    %v488 = vpop.f32.mrf.mxu0
    %v489 = vadd.f32 0.0, %v488
    %v490 = vpop.f32.mrf.mxu0
    %v491 = vpop.f32.mrf.mxu0
    %v492 = vadd.f32 0.0, %v491
    %v493 = vpop.f32.mrf.mxu0
    %494 = vmatprep.mubr.bf16.mxu0 0
    %495 = vmatmul.mubr.bf16.gmra.mxu0 %v318
    %v496 = vpop.f32.mrf.mxu0
    %v497 = vadd.f32 0.0, %v496
    %v498 = vpop.f32.mrf.mxu0
    %v499 = vpop.f32.mrf.mxu0
    %v500 = vadd.f32 0.0, %v499
    %v501 = vpop.f32.mrf.mxu0
    %502 = vmatprep.mubr.bf16.mxu0 0
    %503 = vmatmul.mubr.bf16.gmra.mxu0 %v321
    %v504 = vpop.f32.mrf.mxu0
    %v505 = vadd.f32 0.0, %v504
    %v506 = vpop.f32.mrf.mxu0
    %v507 = vpop.f32.mrf.mxu0
    %v508 = vadd.f32 0.0, %v507
    %v509 = vpop.f32.mrf.mxu0
    %510 = vmatprep.mubr.bf16.mxu0 0
    %511 = vmatmul.mubr.bf16.gmra.mxu0 %v324
    %v512 = vpop.f32.mrf.mxu0
    %v513 = vadd.f32 0.0, %v512
    %v514 = vpop.f32.mrf.mxu0
    %v515 = vpop.f32.mrf.mxu0
    %v516 = vadd.f32 0.0, %v515
    %v517 = vpop.f32.mrf.mxu0
    %518 = vmatprep.mubr.bf16.mxu0 0
    %519 = vmatmul.mubr.bf16.gmra.mxu0 %v327
    %v520 = vpop.f32.mrf.mxu0
    %v521 = vadd.f32 0.0, %v520
    %v522 = vpop.f32.mrf.mxu0
    %v523 = vpop.f32.mrf.mxu0
    %v524 = vadd.f32 0.0, %v523
    %v525 = vpop.f32.mrf.mxu0
    %526 = vmatprep.mubr.bf16.mxu0 0
    %527 = vmatmul.mubr.bf16.gmra.mxu0 %v330
    %v528 = vpop.f32.mrf.mxu0
    %v529 = vadd.f32 0.0, %v528
    %v530 = vpop.f32.mrf.mxu0
    %v531 = vpop.f32.mrf.mxu0
    %v532 = vadd.f32 0.0, %v531
    %v533 = vpop.f32.mrf.mxu0
    %534 = vmatprep.mubr.bf16.mxu0 0
    %535 = vmatmul.mubr.bf16.gmra.mxu0 %v333
    %v536 = vpop.f32.mrf.mxu0
    %v537 = vadd.f32 0.0, %v536
    %v538 = vpop.f32.mrf.mxu0
    %v539 = vpop.f32.mrf.mxu0
    %v540 = vadd.f32 0.0, %v539
    %v541 = vpop.f32.mrf.mxu0
    %542 = vmatprep.mubr.bf16.mxu0 0
    %543 = vmatmul.mubr.bf16.gmra.mxu0 %v336
    %v544 = vpop.f32.mrf.mxu0
    %v545 = vadd.f32 0.0, %v544
    %v546 = vpop.f32.mrf.mxu0
    %v547 = vpop.f32.mrf.mxu0
    %v548 = vadd.f32 0.0, %v547
    %v549 = vpop.f32.mrf.mxu0
    %550 = vmatprep.mubr.bf16.mxu0 0
    %551 = vmatmul.mubr.bf16.gmra.mxu0 %v339
    %v552 = vpop.f32.mrf.mxu0
    %v553 = vadd.f32 0.0, %v552
    %v554 = vpop.f32.mrf.mxu0
    %v555 = vpop.f32.mrf.mxu0
    %v556 = vadd.f32 0.0, %v555
    %v557 = vpop.f32.mrf.mxu0
    %558 = vmatprep.mubr.bf16.mxu0 0
    %559 = vmatmul.mubr.bf16.gmra.mxu0 %v342
    %v560 = vpop.f32.mrf.mxu0
    %v561 = vadd.f32 0.0, %v560
    %v562 = vpop.f32.mrf.mxu0
    %v563 = vpop.f32.mrf.mxu0
    %v564 = vadd.f32 0.0, %v563
    %v565 = vpop.f32.mrf.mxu0
    %566 = vmatprep.mubr.bf16.mxu0 0
    %567 = vmatmul.mubr.bf16.gmra.mxu0 %v345
    %v568 = vpop.f32.mrf.mxu0
    %v569 = vadd.f32 0.0, %v568
    %v570 = vpop.f32.mrf.mxu0
    %v571 = vpop.f32.mrf.mxu0
    %v572 = vadd.f32 0.0, %v571
    %v573 = vpop.f32.mrf.mxu0
    %574 = vmatprep.mubr.bf16.mxu0 0
    %575 = vmatmul.mubr.bf16.gmra.mxu0 %v348
    %v576 = vpop.f32.mrf.mxu0
    %v577 = vadd.f32 0.0, %v576
    %v578 = vpop.f32.mrf.mxu0
    %v579 = vpop.f32.mrf.mxu0
    %v580 = vadd.f32 0.0, %v579
    %v581 = vpop.f32.mrf.mxu0
    %582 = vmatprep.mubr.bf16.mxu0 0
    %583 = vmatmul.mubr.bf16.gmra.mxu0 %v351
    %v584 = vpop.f32.mrf.mxu0
    %v585 = vadd.f32 0.0, %v584
    %v586 = vpop.f32.mrf.mxu0
    %v587 = vpop.f32.mrf.mxu0
    %v588 = vadd.f32 0.0, %v587
    %v589 = vpop.f32.mrf.mxu0
    %590 = vmatprep.mubr.bf16.mxu0 0
    %591 = vmatmul.mubr.bf16.gmra.mxu0 %v354
    %v592 = vpop.f32.mrf.mxu0
    %v593 = vadd.f32 0.0, %v592
    %v594 = vpop.f32.mrf.mxu0
    %v595 = vpop.f32.mrf.mxu0
    %v596 = vadd.f32 0.0, %v595
    %v597 = vpop.f32.mrf.mxu0
    %598 = vmatprep.mubr.bf16.mxu0 0
    %599 = vmatmul.mubr.bf16.gmra.mxu0 %v357
    %v600 = vpop.f32.mrf.mxu0
    %v601 = vadd.f32 0.0, %v600
    %v602 = vpop.f32.mrf.mxu0
    %v603 = vpop.f32.mrf.mxu0
    %v604 = vadd.f32 0.0, %v603
    %v605 = vpop.f32.mrf.mxu0
    %606 = vmatprep.mubr.bf16.mxu0 0
    %607 = vmatmul.mubr.bf16.gmra.mxu0 %v360
    %v608 = vpop.f32.mrf.mxu0
    %v609 = vadd.f32 0.0, %v608
    %v610 = vpop.f32.mrf.mxu0
    %v611 = vpop.f32.mrf.mxu0
    %v612 = vadd.f32 0.0, %v611
    %v613 = vpop.f32.mrf.mxu0
    %614 = vmatprep.mubr.bf16.mxu0 0
    %615 = vmatmul.mubr.bf16.gmra.mxu0 %v363
    %v616 = vpop.f32.mrf.mxu0
    %v617 = vadd.f32 0.0, %v616
    %v618 = vpop.f32.mrf.mxu0
    %v619 = vpop.f32.mrf.mxu0
    %v620 = vadd.f32 0.0, %v619
    %v621 = vpop.f32.mrf.mxu0
    %622 = vmatprep.mubr.bf16.mxu0 0
    %623 = vmatmul.mubr.bf16.gmra.mxu0 %v366
    %v624 = vpop.f32.mrf.mxu0
    %v625 = vadd.f32 0.0, %v624
    %v626 = vpop.f32.mrf.mxu0
    %v627 = vpop.f32.mrf.mxu0
    %v628 = vadd.f32 0.0, %v627
    %v629 = vpop.f32.mrf.mxu0
    %630 = vmatprep.mubr.bf16.mxu0 0
    %631 = vmatmul.mubr.bf16.gmra.mxu0 %v369
    %v632 = vpop.f32.mrf.mxu0
    %v633 = vadd.f32 0.0, %v632
    %v634 = vpop.f32.mrf.mxu0
    %v635 = vpop.f32.mrf.mxu0
    %v636 = vadd.f32 0.0, %v635
    %v637 = vpop.f32.mrf.mxu0
    %638 = vmatprep.mubr.bf16.mxu0 0
    %639 = vmatmul.mubr.bf16.gmra.mxu0 %v372
    %v640 = vpop.f32.mrf.mxu0
    %v641 = vadd.f32 0.0, %v640
    %v642 = vpop.f32.mrf.mxu0
    %v643 = vpop.f32.mrf.mxu0
    %v644 = vadd.f32 0.0, %v643
    %v645 = vpop.f32.mrf.mxu0
    %646 = vmatprep.mubr.bf16.mxu0 0
    %647 = vmatmul.mubr.bf16.gmra.mxu0 %v375
    %v648 = vpop.f32.mrf.mxu0
    %v649 = vadd.f32 0.0, %v648
    %v650 = vpop.f32.mrf.mxu0
    %v651 = vpop.f32.mrf.mxu0
    %v652 = vadd.f32 0.0, %v651
    %v653 = vpop.f32.mrf.mxu0
    %654 = vmatprep.mubr.bf16.mxu0 0
    %655 = vmatmul.mubr.bf16.gmra.mxu0 %v378
    %v656 = vpop.f32.mrf.mxu0
    %v657 = vadd.f32 0.0, %v656
    %v658 = vpop.f32.mrf.mxu0
    %v659 = vpop.f32.mrf.mxu0
    %v660 = vadd.f32 0.0, %v659
    %v661 = vpop.f32.mrf.mxu0
    %662 = vmatprep.mubr.bf16.mxu0 0
    %663 = vmatmul.mubr.bf16.gmra.mxu0 %v381
    %v664 = vpop.f32.mrf.mxu0
    %v665 = vadd.f32 0.0, %v664
    %v666 = vpop.f32.mrf.mxu0
    %v667 = vpop.f32.mrf.mxu0
    %v668 = vadd.f32 0.0, %v667
    %v669 = vpop.f32.mrf.mxu0
    %670 = vmatprep.mubr.bf16.mxu0 0
    %671 = vmatmul.mubr.bf16.gmra.mxu0 %v384
    %v672 = vpop.f32.mrf.mxu0
    %v673 = vadd.f32 0.0, %v672
    %v674 = vpop.f32.mrf.mxu0
    %v675 = vpop.f32.mrf.mxu0
    %v676 = vadd.f32 0.0, %v675
    %v677 = vpop.f32.mrf.mxu0
    %678 = vdwg.mxu0
    %v679 = vpack.c.bf16 %v428, %v425
    %v680 = vpack.c.bf16 %v436, %v433
    %v681 = vpack.c.bf16 %v444, %v441
    %v682 = vpack.c.bf16 %v452, %v449
    %v683 = vpack.c.bf16 %v460, %v457
    %v684 = vpack.c.bf16 %v468, %v465
    %v685 = vpack.c.bf16 %v476, %v473
    %v686 = vpack.c.bf16 %v484, %v481
    %v687 = vpack.c.bf16 %v492, %v489
    %v688 = vpack.c.bf16 %v500, %v497
    %v689 = vpack.c.bf16 %v508, %v505
    %v690 = vpack.c.bf16 %v516, %v513
    %v691 = vpack.c.bf16 %v524, %v521
    %v692 = vpack.c.bf16 %v532, %v529
    %v693 = vpack.c.bf16 %v540, %v537
    %v694 = vpack.c.bf16 %v548, %v545
    %v695 = vpack.c.bf16 %v556, %v553
    %v696 = vpack.c.bf16 %v564, %v561
    %v697 = vpack.c.bf16 %v572, %v569
    %v698 = vpack.c.bf16 %v580, %v577
    %v699 = vpack.c.bf16 %v588, %v585
    %v700 = vpack.c.bf16 %v596, %v593
    %v701 = vpack.c.bf16 %v604, %v601
    %v702 = vpack.c.bf16 %v612, %v609
    %v703 = vpack.c.bf16 %v620, %v617
    %v704 = vpack.c.bf16 %v628, %v625
    %v705 = vpack.c.bf16 %v636, %v633
    %v706 = vpack.c.bf16 %v644, %v641
    %v707 = vpack.c.bf16 %v652, %v649
    %v708 = vpack.c.bf16 %v660, %v657
    %v709 = vpack.c.bf16 %v668, %v665
    %v710 = vpack.c.bf16 %v676, %v673
    %v743 = vunpack.c.l.b16 %v679
    %v744 = vunpack.c.h.b16 %v679
    %v745 = vunpack.c.l.b16 %v680
    %v746 = vunpack.c.h.b16 %v680
    %v747 = vunpack.c.l.b16 %v681
    %v748 = vunpack.c.h.b16 %v681
    %v749 = vunpack.c.l.b16 %v682
    %v750 = vunpack.c.h.b16 %v682
    %v751 = vunpack.c.l.b16 %v683
    %v752 = vunpack.c.h.b16 %v683
    %v753 = vunpack.c.l.b16 %v684
    %v754 = vunpack.c.h.b16 %v684
    %v755 = vunpack.c.l.b16 %v685
    %v756 = vunpack.c.h.b16 %v685
    %v757 = vunpack.c.l.b16 %v686
    %v758 = vunpack.c.h.b16 %v686
    %v759 = vunpack.c.l.b16 %v687
    %v760 = vunpack.c.h.b16 %v687
    %v761 = vunpack.c.l.b16 %v688
    %v762 = vunpack.c.h.b16 %v688
    %v763 = vunpack.c.l.b16 %v689
    %v764 = vunpack.c.h.b16 %v689
    %v765 = vunpack.c.l.b16 %v690
    %v766 = vunpack.c.h.b16 %v690
    %v767 = vunpack.c.l.b16 %v691
    %v768 = vunpack.c.h.b16 %v691
    %v769 = vunpack.c.l.b16 %v692
    %v770 = vunpack.c.h.b16 %v692
    %v771 = vunpack.c.l.b16 %v693
    %v772 = vunpack.c.h.b16 %v693
    %v773 = vunpack.c.l.b16 %v694
    %v774 = vunpack.c.h.b16 %v694
    %v775 = vunpack.c.l.b16 %v695
    %v776 = vunpack.c.h.b16 %v695
    %v777 = vunpack.c.l.b16 %v696
    %v778 = vunpack.c.h.b16 %v696
    %v779 = vunpack.c.l.b16 %v697
    %v780 = vunpack.c.h.b16 %v697
    %v781 = vunpack.c.l.b16 %v698
    %v782 = vunpack.c.h.b16 %v698
    %v783 = vunpack.c.l.b16 %v699
    %v784 = vunpack.c.h.b16 %v699
    %v785 = vunpack.c.l.b16 %v700
    %v786 = vunpack.c.h.b16 %v700
    %v787 = vunpack.c.l.b16 %v701
    %v788 = vunpack.c.h.b16 %v701
    %v789 = vunpack.c.l.b16 %v702
    %v790 = vunpack.c.h.b16 %v702
    %v791 = vunpack.c.l.b16 %v703
    %v792 = vunpack.c.h.b16 %v703
    %v793 = vunpack.c.l.b16 %v704
    %v794 = vunpack.c.h.b16 %v704
    %v795 = vunpack.c.l.b16 %v705
    %v796 = vunpack.c.h.b16 %v705
    %v797 = vunpack.c.l.b16 %v706
    %v798 = vunpack.c.h.b16 %v706
    %v799 = vunpack.c.l.b16 %v707
    %v800 = vunpack.c.h.b16 %v707
    %v801 = vunpack.c.l.b16 %v708
    %v802 = vunpack.c.h.b16 %v708
    %v803 = vunpack.c.l.b16 %v709
    %v804 = vunpack.c.h.b16 %v709
    %v805 = vunpack.c.l.b16 %v710
    %v806 = vunpack.c.h.b16 %v710
    %v807 = vpack.c.b16 %v743, %v743
    %v808 = vpack.c.b16 %v744, %v744
    %v809 = vpack.c.b16 %v745, %v745
    %v810 = vpack.c.b16 %v746, %v746
    %v811 = vpack.c.b16 %v747, %v747
    %v812 = vpack.c.b16 %v748, %v748
    %v813 = vpack.c.b16 %v749, %v749
    %v814 = vpack.c.b16 %v750, %v750
    %v815 = vpack.c.b16 %v751, %v751
    %v816 = vpack.c.b16 %v752, %v752
    %v817 = vpack.c.b16 %v753, %v753
    %v818 = vpack.c.b16 %v754, %v754
    %v819 = vpack.c.b16 %v755, %v755
    %v820 = vpack.c.b16 %v756, %v756
    %v821 = vpack.c.b16 %v757, %v757
    %v822 = vpack.c.b16 %v758, %v758
    %v823 = vpack.c.b16 %v759, %v759
    %v824 = vpack.c.b16 %v760, %v760
    %v825 = vpack.c.b16 %v761, %v761
    %v826 = vpack.c.b16 %v762, %v762
    %v827 = vpack.c.b16 %v763, %v763
    %v828 = vpack.c.b16 %v764, %v764
    %v829 = vpack.c.b16 %v765, %v765
    %v830 = vpack.c.b16 %v766, %v766
    %v831 = vpack.c.b16 %v767, %v767
    %v832 = vpack.c.b16 %v768, %v768
    %v833 = vpack.c.b16 %v769, %v769
    %v834 = vpack.c.b16 %v770, %v770
    %v835 = vpack.c.b16 %v771, %v771
    %v836 = vpack.c.b16 %v772, %v772
    %v837 = vpack.c.b16 %v773, %v773
    %v838 = vpack.c.b16 %v774, %v774
    %v839 = vpack.c.b16 %v775, %v775
    %v840 = vpack.c.b16 %v776, %v776
    %v841 = vpack.c.b16 %v777, %v777
    %v842 = vpack.c.b16 %v778, %v778
    %v843 = vpack.c.b16 %v779, %v779
    %v844 = vpack.c.b16 %v780, %v780
    %v845 = vpack.c.b16 %v781, %v781
    %v846 = vpack.c.b16 %v782, %v782
    %v847 = vpack.c.b16 %v783, %v783
    %v848 = vpack.c.b16 %v784, %v784
    %v849 = vpack.c.b16 %v785, %v785
    %v850 = vpack.c.b16 %v786, %v786
    %v851 = vpack.c.b16 %v787, %v787
    %v852 = vpack.c.b16 %v788, %v788
    %v853 = vpack.c.b16 %v789, %v789
    %v854 = vpack.c.b16 %v790, %v790
    %v855 = vpack.c.b16 %v791, %v791
    %v856 = vpack.c.b16 %v792, %v792
    %v857 = vpack.c.b16 %v793, %v793
    %v858 = vpack.c.b16 %v794, %v794
    %v859 = vpack.c.b16 %v795, %v795
    %v860 = vpack.c.b16 %v796, %v796
    %v861 = vpack.c.b16 %v797, %v797
    %v862 = vpack.c.b16 %v798, %v798
    %v863 = vpack.c.b16 %v799, %v799
    %v864 = vpack.c.b16 %v800, %v800
    %v865 = vpack.c.b16 %v801, %v801
    %v866 = vpack.c.b16 %v802, %v802
    %v867 = vpack.c.b16 %v803, %v803
    %v868 = vpack.c.b16 %v804, %v804
    %v869 = vpack.c.b16 %v805, %v805
    %v870 = vpack.c.b16 %v806, %v806
    %935 = vst [vmem:[#allocation2] sm:$0xf] %v807
    %936 = vst [vmem:[#allocation2 + $0x4] sm:$0xf] %v808
    %937 = vst [vmem:[#allocation2 + $0x8] sm:$0xf] %v809
    %938 = vst [vmem:[#allocation2 + $0xc] sm:$0xf] %v810
    %939 = vst [vmem:[#allocation2 + $0x10] sm:$0xf] %v811
    %940 = vst [vmem:[#allocation2 + $0x14] sm:$0xf] %v812
    %941 = vst [vmem:[#allocation2 + $0x18] sm:$0xf] %v813
    %942 = vst [vmem:[#allocation2 + $0x1c] sm:$0xf] %v814
    %943 = vst [vmem:[#allocation2 + $0x20] sm:$0xf] %v815
    %944 = vst [vmem:[#allocation2 + $0x24] sm:$0xf] %v816
    %945 = vst [vmem:[#allocation2 + $0x28] sm:$0xf] %v817
    %946 = vst [vmem:[#allocation2 + $0x2c] sm:$0xf] %v818
    %947 = vst [vmem:[#allocation2 + $0x30] sm:$0xf] %v819
    %948 = vst [vmem:[#allocation2 + $0x34] sm:$0xf] %v820
    %949 = vst [vmem:[#allocation2 + $0x38] sm:$0xf] %v821
    %950 = vst [vmem:[#allocation2 + $0x3c] sm:$0xf] %v822
    %951 = vst [vmem:[#allocation2 + $0x40] sm:$0xf] %v823
    %952 = vst [vmem:[#allocation2 + $0x44] sm:$0xf] %v824
    %953 = vst [vmem:[#allocation2 + $0x48] sm:$0xf] %v825
    %954 = vst [vmem:[#allocation2 + $0x4c] sm:$0xf] %v826
    %955 = vst [vmem:[#allocation2 + $0x50] sm:$0xf] %v827
    %956 = vst [vmem:[#allocation2 + $0x54] sm:$0xf] %v828
    %957 = vst [vmem:[#allocation2 + $0x58] sm:$0xf] %v829
    %958 = vst [vmem:[#allocation2 + $0x5c] sm:$0xf] %v830
    %959 = vst [vmem:[#allocation2 + $0x60] sm:$0xf] %v831
    %960 = vst [vmem:[#allocation2 + $0x64] sm:$0xf] %v832
    %961 = vst [vmem:[#allocation2 + $0x68] sm:$0xf] %v833
    %962 = vst [vmem:[#allocation2 + $0x6c] sm:$0xf] %v834
    %963 = vst [vmem:[#allocation2 + $0x70] sm:$0xf] %v835
    %964 = vst [vmem:[#allocation2 + $0x74] sm:$0xf] %v836
    %965 = vst [vmem:[#allocation2 + $0x78] sm:$0xf] %v837
    %966 = vst [vmem:[#allocation2 + $0x7c] sm:$0xf] %v838
    %967 = vst [vmem:[#allocation2 + $0x80] sm:$0xf] %v839
    %968 = vst [vmem:[#allocation2 + $0x84] sm:$0xf] %v840
    %969 = vst [vmem:[#allocation2 + $0x88] sm:$0xf] %v841
    %970 = vst [vmem:[#allocation2 + $0x8c] sm:$0xf] %v842
    %971 = vst [vmem:[#allocation2 + $0x90] sm:$0xf] %v843
    %972 = vst [vmem:[#allocation2 + $0x94] sm:$0xf] %v844
    %973 = vst [vmem:[#allocation2 + $0x98] sm:$0xf] %v845
    %974 = vst [vmem:[#allocation2 + $0x9c] sm:$0xf] %v846
    %975 = vst [vmem:[#allocation2 + $0xa0] sm:$0xf] %v847
    %976 = vst [vmem:[#allocation2 + $0xa4] sm:$0xf] %v848
    %977 = vst [vmem:[#allocation2 + $0xa8] sm:$0xf] %v849
    %978 = vst [vmem:[#allocation2 + $0xac] sm:$0xf] %v850
    %979 = vst [vmem:[#allocation2 + $0xb0] sm:$0xf] %v851
    %980 = vst [vmem:[#allocation2 + $0xb4] sm:$0xf] %v852
    %981 = vst [vmem:[#allocation2 + $0xb8] sm:$0xf] %v853
    %982 = vst [vmem:[#allocation2 + $0xbc] sm:$0xf] %v854
    %983 = vst [vmem:[#allocation2 + $0xc0] sm:$0xf] %v855
    %984 = vst [vmem:[#allocation2 + $0xc4] sm:$0xf] %v856
    %985 = vst [vmem:[#allocation2 + $0xc8] sm:$0xf] %v857
    %986 = vst [vmem:[#allocation2 + $0xcc] sm:$0xf] %v858
    %987 = vst [vmem:[#allocation2 + $0xd0] sm:$0xf] %v859
    %988 = vst [vmem:[#allocation2 + $0xd4] sm:$0xf] %v860
    %989 = vst [vmem:[#allocation2 + $0xd8] sm:$0xf] %v861
    %990 = vst [vmem:[#allocation2 + $0xdc] sm:$0xf] %v862
    %991 = vst [vmem:[#allocation2 + $0xe0] sm:$0xf] %v863
    %992 = vst [vmem:[#allocation2 + $0xe4] sm:$0xf] %v864
    %993 = vst [vmem:[#allocation2 + $0xe8] sm:$0xf] %v865
    %994 = vst [vmem:[#allocation2 + $0xec] sm:$0xf] %v866
    %995 = vst [vmem:[#allocation2 + $0xf0] sm:$0xf] %v867
    %996 = vst [vmem:[#allocation2 + $0xf4] sm:$0xf] %v868
    %997 = vst [vmem:[#allocation2 + $0xf8] sm:$0xf] %v869
    %998 = vst [vmem:[#allocation2 + $0xfc] sm:$0xf] %v870
    %v999 = vadd.f32 %v425, %v428
    %v1000 = vadd.f32 %v999, %v433
    %v1001 = vadd.f32 %v1000, %v436
    %v1002 = vadd.f32 %v1001, %v441
    %v1003 = vadd.f32 %v1002, %v444
    %v1004 = vadd.f32 %v1003, %v449
    %v1005 = vadd.f32 %v1004, %v452
    %v1006 = vadd.f32 %v1005, %v457
    %v1007 = vadd.f32 %v1006, %v460
    %v1008 = vadd.f32 %v1007, %v465
    %v1009 = vadd.f32 %v1008, %v468
    %v1010 = vadd.f32 %v1009, %v473
    %v1011 = vadd.f32 %v1010, %v476
    %v1012 = vadd.f32 %v1011, %v481
    %v1013 = vadd.f32 %v1012, %v484
    %v1014 = vadd.f32 %v1013, %v489
    %v1015 = vadd.f32 %v1014, %v492
    %v1016 = vadd.f32 %v1015, %v497
    %v1017 = vadd.f32 %v1016, %v500
    %v1018 = vadd.f32 %v1017, %v505
    %v1019 = vadd.f32 %v1018, %v508
    %v1020 = vadd.f32 %v1019, %v513
    %v1021 = vadd.f32 %v1020, %v516
    %v1022 = vadd.f32 %v1021, %v521
    %v1023 = vadd.f32 %v1022, %v524
    %v1024 = vadd.f32 %v1023, %v529
    %v1025 = vadd.f32 %v1024, %v532
    %v1026 = vadd.f32 %v1025, %v537
    %v1027 = vadd.f32 %v1026, %v540
    %v1028 = vadd.f32 %v1027, %v545
    %v1029 = vadd.f32 %v1028, %v548
    %v1030 = vadd.f32 %v1029, %v553
    %v1031 = vadd.f32 %v1030, %v556
    %v1032 = vadd.f32 %v1031, %v561
    %v1033 = vadd.f32 %v1032, %v564
    %v1034 = vadd.f32 %v1033, %v569
    %v1035 = vadd.f32 %v1034, %v572
    %v1036 = vadd.f32 %v1035, %v577
    %v1037 = vadd.f32 %v1036, %v580
    %v1038 = vadd.f32 %v1037, %v585
    %v1039 = vadd.f32 %v1038, %v588
    %v1040 = vadd.f32 %v1039, %v593
    %v1041 = vadd.f32 %v1040, %v596
    %v1042 = vadd.f32 %v1041, %v601
    %v1043 = vadd.f32 %v1042, %v604
    %v1044 = vadd.f32 %v1043, %v609
    %v1045 = vadd.f32 %v1044, %v612
    %v1046 = vadd.f32 %v1045, %v617
    %v1047 = vadd.f32 %v1046, %v620
    %v1048 = vadd.f32 %v1047, %v625
    %v1049 = vadd.f32 %v1048, %v628
    %v1050 = vadd.f32 %v1049, %v633
    %v1051 = vadd.f32 %v1050, %v636
    %v1052 = vadd.f32 %v1051, %v641
    %v1053 = vadd.f32 %v1052, %v644
    %v1054 = vadd.f32 %v1053, %v649
    %v1055 = vadd.f32 %v1054, %v652
    %v1056 = vadd.f32 %v1055, %v657
    %v1057 = vadd.f32 %v1056, %v660
    %v1058 = vadd.f32 %v1057, %v665
    %v1059 = vadd.f32 %v1058, %v668
    %v1060 = vadd.f32 %v1059, %v673
    %v1061 = vadd.f32 %v1060, %v676
    %v1062 = vrot.slane %v1061, 4
    %v1063 = vadd.f32 %v1061, %v1062
    %v1064 = vrot.slane %v1063, 2
    %v1065 = vadd.f32 %v1063, %v1064
    %v1066 = vrot.slane %v1065, 1
    %v1067 = vadd.f32 %v1065, %v1066
    %v1068 = vmul.f32 %v425, %v425
    %v1069 = vmul.f32 %v428, %v428
    %v1070 = vmul.f32 %v433, %v433
    %v1071 = vmul.f32 %v436, %v436
    %v1072 = vmul.f32 %v441, %v441
    %v1073 = vmul.f32 %v444, %v444
    %v1074 = vmul.f32 %v449, %v449
    %v1075 = vmul.f32 %v452, %v452
    %v1076 = vmul.f32 %v457, %v457
    %v1077 = vmul.f32 %v460, %v460
    %v1078 = vmul.f32 %v465, %v465
    %v1079 = vmul.f32 %v468, %v468
    %v1080 = vmul.f32 %v473, %v473
    %v1081 = vmul.f32 %v476, %v476
    %v1082 = vmul.f32 %v481, %v481
    %v1083 = vmul.f32 %v484, %v484
    %v1084 = vmul.f32 %v489, %v489
    %v1085 = vmul.f32 %v492, %v492
    %v1086 = vmul.f32 %v497, %v497
    %v1087 = vmul.f32 %v500, %v500
    %v1088 = vmul.f32 %v505, %v505
    %v1089 = vmul.f32 %v508, %v508
    %v1090 = vmul.f32 %v513, %v513
    %v1091 = vmul.f32 %v516, %v516
    %v1092 = vmul.f32 %v521, %v521
    %v1093 = vmul.f32 %v524, %v524
    %v1094 = vmul.f32 %v529, %v529
    %v1095 = vmul.f32 %v532, %v532
    %v1096 = vmul.f32 %v537, %v537
    %v1097 = vmul.f32 %v540, %v540
    %v1098 = vmul.f32 %v545, %v545
    %v1099 = vmul.f32 %v548, %v548
    %v1100 = vmul.f32 %v553, %v553
    %v1101 = vmul.f32 %v556, %v556
    %v1102 = vmul.f32 %v561, %v561
    %v1103 = vmul.f32 %v564, %v564
    %v1104 = vmul.f32 %v569, %v569
    %v1105 = vmul.f32 %v572, %v572
    %v1106 = vmul.f32 %v577, %v577
    %v1107 = vmul.f32 %v580, %v580
    %v1108 = vmul.f32 %v585, %v585
    %v1109 = vmul.f32 %v588, %v588
    %v1110 = vmul.f32 %v593, %v593
    %v1111 = vmul.f32 %v596, %v596
    %v1112 = vmul.f32 %v601, %v601
    %v1113 = vmul.f32 %v604, %v604
    %v1114 = vmul.f32 %v609, %v609
    %v1115 = vmul.f32 %v612, %v612
    %v1116 = vmul.f32 %v617, %v617
    %v1117 = vmul.f32 %v620, %v620
    %v1118 = vmul.f32 %v625, %v625
    %v1119 = vmul.f32 %v628, %v628
    %v1120 = vmul.f32 %v633, %v633
    %v1121 = vmul.f32 %v636, %v636
    %v1122 = vmul.f32 %v641, %v641
    %v1123 = vmul.f32 %v644, %v644
    %v1124 = vmul.f32 %v649, %v649
    %v1125 = vmul.f32 %v652, %v652
    %v1126 = vmul.f32 %v657, %v657
    %v1127 = vmul.f32 %v660, %v660
    %v1128 = vmul.f32 %v665, %v665
    %v1129 = vmul.f32 %v668, %v668
    %v1130 = vmul.f32 %v673, %v673
    %v1131 = vmul.f32 %v676, %v676
    %v1132 = vadd.f32 %v1068, %v1069
    %v1133 = vadd.f32 %v1132, %v1070
    %v1134 = vadd.f32 %v1133, %v1071
    %v1135 = vadd.f32 %v1134, %v1072
    %v1136 = vadd.f32 %v1135, %v1073
    %v1137 = vadd.f32 %v1136, %v1074
    %v1138 = vadd.f32 %v1137, %v1075
    %v1139 = vadd.f32 %v1138, %v1076
    %v1140 = vadd.f32 %v1139, %v1077
    %v1141 = vadd.f32 %v1140, %v1078
    %v1142 = vadd.f32 %v1141, %v1079
    %v1143 = vadd.f32 %v1142, %v1080
    %v1144 = vadd.f32 %v1143, %v1081
    %v1145 = vadd.f32 %v1144, %v1082
    %v1146 = vadd.f32 %v1145, %v1083
    %v1147 = vadd.f32 %v1146, %v1084
    %v1148 = vadd.f32 %v1147, %v1085
    %v1149 = vadd.f32 %v1148, %v1086
    %v1150 = vadd.f32 %v1149, %v1087
    %v1151 = vadd.f32 %v1150, %v1088
    %v1152 = vadd.f32 %v1151, %v1089
    %v1153 = vadd.f32 %v1152, %v1090
    %v1154 = vadd.f32 %v1153, %v1091
    %v1155 = vadd.f32 %v1154, %v1092
    %v1156 = vadd.f32 %v1155, %v1093
    %v1157 = vadd.f32 %v1156, %v1094
    %v1158 = vadd.f32 %v1157, %v1095
    %v1159 = vadd.f32 %v1158, %v1096
    %v1160 = vadd.f32 %v1159, %v1097
    %v1161 = vadd.f32 %v1160, %v1098
    %v1162 = vadd.f32 %v1161, %v1099
    %v1163 = vadd.f32 %v1162, %v1100
    %v1164 = vadd.f32 %v1163, %v1101
    %v1165 = vadd.f32 %v1164, %v1102
    %v1166 = vadd.f32 %v1165, %v1103
    %v1167 = vadd.f32 %v1166, %v1104
    %v1168 = vadd.f32 %v1167, %v1105
    %v1169 = vadd.f32 %v1168, %v1106
    %v1170 = vadd.f32 %v1169, %v1107
    %v1171 = vadd.f32 %v1170, %v1108
    %v1172 = vadd.f32 %v1171, %v1109
    %v1173 = vadd.f32 %v1172, %v1110
    %v1174 = vadd.f32 %v1173, %v1111
    %v1175 = vadd.f32 %v1174, %v1112
    %v1176 = vadd.f32 %v1175, %v1113
    %v1177 = vadd.f32 %v1176, %v1114
    %v1178 = vadd.f32 %v1177, %v1115
    %v1179 = vadd.f32 %v1178, %v1116
    %v1180 = vadd.f32 %v1179, %v1117
    %v1181 = vadd.f32 %v1180, %v1118
    %v1182 = vadd.f32 %v1181, %v1119
    %v1183 = vadd.f32 %v1182, %v1120
    %v1184 = vadd.f32 %v1183, %v1121
    %v1185 = vadd.f32 %v1184, %v1122
    %v1186 = vadd.f32 %v1185, %v1123
    %v1187 = vadd.f32 %v1186, %v1124
    %v1188 = vadd.f32 %v1187, %v1125
    %v1189 = vadd.f32 %v1188, %v1126
    %v1190 = vadd.f32 %v1189, %v1127
    %v1191 = vadd.f32 %v1190, %v1128
    %v1192 = vadd.f32 %v1191, %v1129
    %v1193 = vadd.f32 %v1192, %v1130
    %v1194 = vadd.f32 %v1193, %v1131
    %v1195 = vrot.slane %v1194, 4
    %v1196 = vadd.f32 %v1194, %v1195
    %v1197 = vrot.slane %v1196, 2
    %v1198 = vadd.f32 %v1196, %v1197
    %v1199 = vrot.slane %v1198, 1
    %v1200 = vadd.f32 %v1198, %v1199
    %vm1201 = vcmask 1040384
    %v1202 = vsel %vm1201, %v1067, %v1200
    %v1203 = vld [vmem:[#allocation4] sm:$0x3]
    %v1204 = vadd.f32 %v1203, %v1202
    %1205 = vst [vmem:[#allocation4] sm:$0x3] %v1204
    // Predicated region
    $region14: #{tpu_custom_call.1} parent=1 // pred_check
      _
    $region15: #{tpu_custom_call.1} parent=1 // pred_check_branch
      %1207 = sbr.rel (0) target = $region17
    $region16: #{tpu_custom_call.1} parent=1 // pred_region
      %s1208 = sadd.s32 0, 0
      %s1209 = smul.u32 64, %s1208
      %s1211 = ssub.s32 4096, 4096
      %1212 = vsyncadd [#allocation3], %s1211
      %s1213 = smul.addr %s1209, 64
      %s1214 = scalar_lea.hbm %s2, %s1213
      %s1215 = sshll.u32 [#allocation2], 4
      %s1216 = int_to_ptr.vmem [resolvable:$true] %s1215
      %1221 = dma.vmem_to_hbm [thread:$0]  %s1216, 4096, %s1214, [#allocation3], 64, 64, 4
    $region17: #{tpu_custom_call.1} parent=1 // pred_fallthru
      _
    // Predicated region
    $region18: #{tpu_custom_call.1} parent=1 // pred_check
      _
    $region19: #{tpu_custom_call.1} parent=1 // pred_check_branch
      %1223 = sbr.rel (0) target = $region21
    $region20: #{tpu_custom_call.1} parent=1 // pred_region
      %s1225 = ssub.s32 128, 128
      %1226 = vsyncadd [#allocation5], %s1225
      %s1228 = sshll.u32 [#allocation4], 4
      %s1229 = int_to_ptr.vmem [resolvable:$true] %s1228
      %1231 = dma.vmem_to_hbm [thread:$0]  %s1229, 128, %s3, [#allocation5]
    $region21: #{tpu_custom_call.1} parent=1 // pred_fallthru
      _
    // Predicated region
    $region22: #{tpu_custom_call.1} parent=1 // pred_check
      _
    $region23: #{tpu_custom_call.1} parent=1 // pred_check_branch
      %1233 = sbr.rel (0) target = $region25
    $region24: #{tpu_custom_call.1} parent=1 // pred_region
      %1234 = dma.done [#allocation3], 4096
    $region25: #{tpu_custom_call.1} parent=1 // pred_fallthru
      _
    // Predicated region
    $region26: #{tpu_custom_call.1} parent=1 // pred_check
      _
    $region27: #{tpu_custom_call.1} parent=1 // pred_check_branch
      %1236 = sbr.rel (0) target = $region29
    $region28: #{tpu_custom_call.1} parent=1 // pred_region
      %1237 = dma.done [#allocation5], 128
    $region29: #{tpu_custom_call.1} parent=1 // pred_fallthru
      _
    %1238 = vsyncpa [#allocation3], 1
    %1239 = vsyncpa [#allocation5], 1

</llo_original>
